<compile_context>
chip_gen: v7x
topology: tpu7x:2x2x1
jax: 0.10.0
libtpu: 0.0.40
codegen_flags: <defaults>
</compile_context>

<pallas_src>
import jax
import jax.numpy as jnp
from jax.experimental import pallas as pl
from jax.experimental.pallas import tpu as pltpu


def mlp_kernel(x_ref, w1_ref, b1_ref, w2_ref, b2_ref, o_ref):
    # fc1 on the MXU, f32 operands, f32 accumulation.
    h = jnp.dot(x_ref[...], w1_ref[...], preferred_element_type=jnp.float32)
    # bias + tanh in f32 (VPU + EUP).
    h = jnp.tanh(h + b1_ref[...])
    # fc2 on the MXU (N=16), f32 accumulation.
    y = jnp.dot(h, w2_ref[...], preferred_element_type=jnp.float32)
    # (TB, 16) store: masked lanes in VMEM, but the HBM-side array is compact
    # row-major (64 B/row) — identical bytes to an 8-row/128-lane packed layout.
    o_ref[...] = (y + b2_ref[...]).astype(o_ref.dtype)


def _round_up(x, m):
    return ((x + m - 1) // m) * m


def _choose_batch_tile(batch, tb_max):
    """Batch rows per grid step (always a multiple of 8)."""
    if batch > tb_max:
        return tb_max
    tb = _round_up(max(batch, 8), 8)
    if tb >= 2048:
        # Mid-size batch: split into >=2 grid steps so the "parallel" grid axis
        # can be sharded across both TensorCores on v7x (no-op on v5e/v6e).
        tb = _round_up((batch + 1) // 2, 8)
    return tb


def simple_forward(x, w1, b1, w2, b2, *, tb_max=4096):
    """x: (B, in_dim) f32, w1: (in_dim, hidden), b1: (hidden,),
    w2: (hidden, out_dim), b2: (out_dim,)  ->  (B, out_dim) f32.

    Weights are stored (in_features, out_features), i.e. transposed relative to
    nn.Linear's (out, in), so the kernel is a plain x @ W on the MXU.

    tb_max: cap on rows per grid step.  4096 keeps the (lane-padded) x/out
    double buffers ~8 MiB, under the scoped-VMEM defaults of every generation
    (v5e 16 MiB, v6e/v7x 32 MiB).  Raising it past ~8192 requires an explicit
    pltpu.CompilerParams(vmem_limit_bytes=...).
    """
    B, in_dim = x.shape
    hidden = w1.shape[1]
    out_dim = w2.shape[1]

    TB = _choose_batch_tile(B, tb_max)
    grid = (pl.cdiv(B, TB),)   # partial last block if TB does not divide B

    # Biases as (1, N) rows for in-kernel broadcast; trivial prep, fused by jit.
    b1_2d = b1.reshape(1, hidden).astype(jnp.float32)
    b2_2d = b2.reshape(1, out_dim).astype(jnp.float32)

    return pl.pallas_call(
        mlp_kernel,
        out_shape=jax.ShapeDtypeStruct((B, out_dim), jnp.float32),
        grid_spec=pltpu.PrefetchScalarGridSpec(
            num_scalar_prefetch=0,
            grid=grid,
            in_specs=[
                # x tile advances with the grid; weights/biases stay resident
                # (constant index_map -> fetched once, no re-DMA per step).
                pl.BlockSpec((TB, in_dim), lambda i: (i, 0)),
                pl.BlockSpec((in_dim, hidden), lambda i: (0, 0)),
                pl.BlockSpec((1, hidden), lambda i: (0, 0)),
                pl.BlockSpec((hidden, out_dim), lambda i: (0, 0)),
                pl.BlockSpec((1, out_dim), lambda i: (0, 0)),
            ],
            out_specs=pl.BlockSpec((TB, out_dim), lambda i: (i, 0)),
        ),
        compiler_params=pltpu.CompilerParams(
            # batch axis is embarrassingly parallel -> megacore sharding on v7x.
            dimension_semantics=("parallel",),
        ),
    )(x, w1, b1_2d, w2, b2_2d)


def init_params(key, in_dim, out_dim, dtype=jnp.float32):
    """Faithful to the PyTorch module's __init__ (weights in (in, out) layout):
       fc1.weight ~ Normal(0, in_dim^-0.5), fc1.bias = 0
       fc2.weight = 0,                      fc2.bias = 0
    """
    hidden = out_dim * 8
    w1 = (in_dim ** -0.5) * jax.random.normal(key, (in_dim, hidden), dtype=dtype)
    b1 = jnp.zeros((hidden,), dtype=dtype)
    w2 = jnp.zeros((hidden, out_dim), dtype=dtype)
    b2 = jnp.zeros((out_dim,), dtype=dtype)
    return w1, b1, w2, b2


if __name__ == "__main__":
    key = jax.random.PRNGKey(0)
    k_x, k_w1, k_b1, k_w2, k_b2, k_x2, k_x3 = jax.random.split(key, 7)

    in_dim, out_dim = 32, 16          # hidden = out_dim * 8 = 128
    hidden = out_dim * 8

    w1 = (in_dim ** -0.5) * jax.random.normal(k_w1, (in_dim, hidden), jnp.float32)
    b1 = 0.1 * jax.random.normal(k_b1, (hidden,), jnp.float32)
    w2 = (hidden ** -0.5) * jax.random.normal(k_w2, (hidden, out_dim), jnp.float32)
    b2 = 0.1 * jax.random.normal(k_b2, (out_dim,), jnp.float32)

    fwd = jax.jit(simple_forward)
    HI = jax.lax.Precision.HIGHEST

    def ref(xv):
        h = jnp.tanh(jnp.dot(xv, w1, precision=HI) + b1)
        return jnp.dot(h, w2, precision=HI) + b2

    # ---- check 1: small batch, single exact tile -----------------------------
    x = jax.random.normal(k_x, (8, in_dim), jnp.float32)
    y = jax.block_until_ready(fwd(x, w1, b1, w2, b2))
    assert y.shape == (8, out_dim)
    assert jnp.allclose(y, ref(x), atol=1e-2, rtol=1e-2)

    # ---- check 2: batch not a multiple of 8 -> partial block path ------------
    x2 = jax.random.normal(k_x2, (100, in_dim), jnp.float32)
    y2 = jax.block_until_ready(fwd(x2, w1, b1, w2, b2))
    assert y2.shape == (100, out_dim)
    assert jnp.allclose(y2, ref(x2), atol=1e-2, rtol=1e-2)

    # ---- check 3: multi-step grid (TB=4096) + partial last block -------------
    x3 = jax.random.normal(k_x3, (10000, in_dim), jnp.float32)
    y3 = jax.block_until_ready(fwd(x3, w1, b1, w2, b2))
    assert y3.shape == (10000, out_dim)
    assert jnp.allclose(y3, ref(x3), atol=1e-2, rtol=1e-2)

    # ---- check 4: PyTorch-faithful init (fc2 zero-init -> zero output) -------
    w1i, b1i, w2i, b2i = init_params(k_w1, in_dim, out_dim)
    y4 = jax.block_until_ready(fwd(x, w1i, b1i, w2i, b2i))
    assert jnp.allclose(y4, jnp.zeros((8, out_dim)), atol=1e-6)

    # TODO(synk): l2_reg() is a training-time regularizer, not part of forward;
    # it is intentionally not implemented as a kernel.
    print("KERNEL_OK")
</pallas_src>

<mosaic_0001>
module attributes {stable_mosaic.version = 11 : i64} {
  func.func @mlp_kernel(%arg0: i32, %arg1: memref<8x32xf32, #tpu.memory_space<vmem>>, %arg2: memref<32x128xf32, #tpu.memory_space<vmem>>, %arg3: memref<1x128xf32, #tpu.memory_space<vmem>>, %arg4: memref<128x16xf32, #tpu.memory_space<vmem>>, %arg5: memref<1x16xf32, #tpu.memory_space<vmem>>, %arg6: memref<8x16xf32, #tpu.memory_space<vmem>>) attributes {dimension_semantics = [#tpu.dimension_semantics<parallel>], iteration_bounds = array<i64: 1>, scalar_prefetch = 0 : i64, scratch_operands = 0 : i64, tpu.core_type = #tpu.core_type<tc>, window_params = [{transform_indices = @transform_0, window_bounds = array<i64: 8, 32>}, {pipeline_mode = #tpu.pipeline_mode<synchronous>, transform_indices = @transform_1, window_bounds = array<i64: 32, 128>}, {pipeline_mode = #tpu.pipeline_mode<synchronous>, transform_indices = @transform_2, window_bounds = array<i64: 1, 128>}, {pipeline_mode = #tpu.pipeline_mode<synchronous>, transform_indices = @transform_3, window_bounds = array<i64: 128, 16>}, {pipeline_mode = #tpu.pipeline_mode<synchronous>, transform_indices = @transform_4, window_bounds = array<i64: 1, 16>}, {transform_indices = @transform_5, window_bounds = array<i64: 8, 16>}]} {
    %c0 = arith.constant 0 : index
    %c0_0 = arith.constant 0 : index
    %0 = vector.load %arg1[%c0, %c0_0] : memref<8x32xf32, #tpu.memory_space<vmem>>, vector<8x32xf32>
    %c0_1 = arith.constant 0 : index
    %c0_2 = arith.constant 0 : index
    %1 = vector.load %arg2[%c0_1, %c0_2] : memref<32x128xf32, #tpu.memory_space<vmem>>, vector<32x128xf32>
    %cst = arith.constant dense<0.000000e+00> : vector<8x128xf32>
    %2 = tpu.matmul %0, %1, %cst {dimension_numbers = #tpu.dot_dimension_numbers<[1], [0], [0], [1], [0, 0, 1, 1], [], []>} : vector<8x32xf32>, vector<32x128xf32>, vector<8x128xf32> -> vector<8x128xf32>
    %c0_3 = arith.constant 0 : index
    %c0_4 = arith.constant 0 : index
    %3 = vector.load %arg3[%c0_3, %c0_4] : memref<1x128xf32, #tpu.memory_space<vmem>>, vector<1x128xf32>
    %4 = vector.broadcast %3 : vector<1x128xf32> to vector<8x128xf32>
    %5 = arith.addf %2, %4 : vector<8x128xf32>
    %6 = math.tanh %5 : vector<8x128xf32>
    %c0_5 = arith.constant 0 : index
    %c0_6 = arith.constant 0 : index
    %7 = vector.load %arg4[%c0_5, %c0_6] : memref<128x16xf32, #tpu.memory_space<vmem>>, vector<128x16xf32>
    %cst_7 = arith.constant dense<0.000000e+00> : vector<8x16xf32>
    %8 = tpu.matmul %6, %7, %cst_7 {dimension_numbers = #tpu.dot_dimension_numbers<[1], [0], [0], [1], [0, 0, 1, 1], [], []>} : vector<8x128xf32>, vector<128x16xf32>, vector<8x16xf32> -> vector<8x16xf32>
    %c0_8 = arith.constant 0 : index
    %c0_9 = arith.constant 0 : index
    %9 = vector.load %arg5[%c0_8, %c0_9] : memref<1x16xf32, #tpu.memory_space<vmem>>, vector<1x16xf32>
    %10 = vector.broadcast %9 : vector<1x16xf32> to vector<8x16xf32>
    %11 = arith.addf %8, %10 : vector<8x16xf32>
    %c0_10 = arith.constant 0 : index
    %c0_11 = arith.constant 0 : index
    %12 = vector.load %arg6[%c0_10, %c0_11] : memref<8x16xf32, #tpu.memory_space<vmem>>, vector<8x16xf32>
    tpu.vector_store %arg6[%c0_10, %c0_11], %11 {strides = array<i32>} : memref<8x16xf32, #tpu.memory_space<vmem>>, vector<8x16xf32>,
    return
  }
  func.func @transform_0(%arg0: i32) -> (i32, i32) {
    %c0_i32 = arith.constant 0 : i32
    %c0_i32_0 = arith.constant 0 : i32
    return %arg0, %c0_i32 : i32, i32
  }
  func.func @transform_1(%arg0: i32) -> (i32, i32) {
    %c0_i32 = arith.constant 0 : i32
    %c0_i32_0 = arith.constant 0 : i32
    %c0_i32_1 = arith.constant 0 : i32
    return %c0_i32, %c0_i32_0 : i32, i32
  }
  func.func @transform_2(%arg0: i32) -> (i32, i32) {
    %c0_i32 = arith.constant 0 : i32
    %c0_i32_0 = arith.constant 0 : i32
    %c0_i32_1 = arith.constant 0 : i32
    return %c0_i32, %c0_i32_0 : i32, i32
  }
  func.func @transform_3(%arg0: i32) -> (i32, i32) {
    %c0_i32 = arith.constant 0 : i32
    %c0_i32_0 = arith.constant 0 : i32
    %c0_i32_1 = arith.constant 0 : i32
    return %c0_i32, %c0_i32_0 : i32, i32
  }
  func.func @transform_4(%arg0: i32) -> (i32, i32) {
    %c0_i32 = arith.constant 0 : i32
    %c0_i32_0 = arith.constant 0 : i32
    %c0_i32_1 = arith.constant 0 : i32
    return %c0_i32, %c0_i32_0 : i32, i32
  }
  func.func @transform_5(%arg0: i32) -> (i32, i32) {
    %c0_i32 = arith.constant 0 : i32
    %c0_i32_0 = arith.constant 0 : i32
    return %arg0, %c0_i32 : i32, i32
  }
}

</mosaic_0001>

<llo_original>
// kernel: simple_forward.1
$region0: #{simple_forward.1}
  #allocation0 [shape = 'u32[]', space=smem, size = 0x4, offset = 0x4, fixed_abs, tag = 'smem constant byte address 0x4 - core index']
  #allocation1 [shape = 'u32[144,128]{1,0:T(1,128)}', space=vmem, size = 0x12000, scoped, tag = 'internal scratch']
  %s0 = inlined_call_operand.vmem [shape: f32[8,32], index: 0, kind: input, shape index: {}]
  %s1 = inlined_call_operand.vmem [shape: f32[32,128], index: 1, kind: input, shape index: {}]
  %s2 = inlined_call_operand.vmem [shape: f32[1,128], index: 2, kind: input, shape index: {}]
  %s3 = inlined_call_operand.vmem [shape: f32[128,16], index: 3, kind: input, shape index: {}]
  %s4 = inlined_call_operand.vmem [shape: f32[1,16], index: 4, kind: input, shape index: {}]
  %s5 = inlined_call_operand.hbm [shape: f32[8,16], index: 5, kind: output, shape index: {}]
  %s6 = sld [smem:[#allocation0]]
  $region30: #{simple_forward.1} parent=0
    _
  %s8 = ssub.s32 1, %s6
  %s9 = scalar_select 0, %s8, %s6
  $region1: #{simple_forward.1} parent=0
    #allocation2 [shape = 'u8[4096]{0}', space=vmem, size = 0x1000, scoped, tag = 'output window, operand 0, single buffered']
    #allocation3 [shape = 's32[1]{0}', space=sflag, size = 0x4, scoped, tag = 'scoped memory for simple_forward.1']
    %10 = vsyncpa [#allocation3], 0
    // Predicated region
    $region2: #{simple_forward.1} parent=1 // pred_check
      _
    $region3: #{simple_forward.1} parent=1 // pred_check_branch
      %12 = sbr.rel (0) target = $region5
    $region4: #{simple_forward.1} parent=1 // pred_region
      _
    $region5: #{simple_forward.1} parent=1 // pred_fallthru
      _
    // Predicated region
    $region6: #{simple_forward.1} parent=1 // pred_check
      _
    $region7: #{simple_forward.1} parent=1 // pred_check_branch
      %14 = sbr.rel (0) target = $region9
    $region8: #{simple_forward.1} parent=1 // pred_region
      _
    $region9: #{simple_forward.1} parent=1 // pred_fallthru
      _
    // Predicated region
    $region10: #{simple_forward.1} parent=1 // pred_check
      _
    $region11: #{simple_forward.1} parent=1 // pred_check_branch
      %16 = sbr.rel (0) target = $region13
    $region12: #{simple_forward.1} parent=1 // pred_region
      _
    $region13: #{simple_forward.1} parent=1 // pred_fallthru
      _
    // Predicated region
    $region14: #{simple_forward.1} parent=1 // pred_check
      _
    $region15: #{simple_forward.1} parent=1 // pred_check_branch
      %18 = sbr.rel (0) target = $region17
    $region16: #{simple_forward.1} parent=1 // pred_region
      _
    $region17: #{simple_forward.1} parent=1 // pred_fallthru
      _
    // Predicated region
    $region18: #{simple_forward.1} parent=1 // pred_check
      _
    $region19: #{simple_forward.1} parent=1 // pred_check_branch
      %20 = sbr.rel (0) target = $region21
    $region20: #{simple_forward.1} parent=1 // pred_region
      _
    $region21: #{simple_forward.1} parent=1 // pred_fallthru
      _
    %v21 = vld [vmem:[%s0] sm:$0xff]
    %v22 = vld [vmem:[%s1] sm:$0xff]
    %v23 = vld [vmem:[%s1 + $0x8] sm:$0xff]
    %v24 = vld [vmem:[%s1 + $0x10] sm:$0xff]
    %v25 = vld [vmem:[%s1 + $0x18] sm:$0xff]
    %v26 = vld [vmem:[%s2] sm:$0x1]
    %v28 = vlaneseq
    %v29 = vshrl.u32 %v28, 7
    %v30 = vsub.s32 0, %v29
    %v31 = vrot.slane %v26, %v30
    %vm33 = vcmask 261120
    %v35 = vsel %vm33, %v21, 0
    %37 = vmatprep.subr.mxu0 0.0
    %38 = vmatpush1.msra.mxu0 %v22
    %39 = vmatprep.subr.mxu0 0.0
    %40 = vmatpush1.msra.mxu0 %v23
    %41 = vmatprep.subr.mxu0 0.0
    %42 = vmatpush1.msra.mxu0 %v24
    %43 = vmatprep.subr.mxu0 0.0
    %44 = vmatpush1.msra.mxu0 %v25
    %45 = vmatprep.subr.mxu0 0.0
    %46 = vmatpush1.msra.mxu0 0.0
    %47 = vmatprep.subr.mxu0 0.0
    %48 = vmatpush1.msra.mxu0 0.0
    %49 = vmatprep.subr.mxu0 0.0
    %50 = vmatpush1.msra.mxu0 0.0
    %51 = vmatprep.subr.mxu0 0.0
    %52 = vmatpush1.msra.mxu0 0.0
    %53 = vmatprep.subr.mxu0 0.0
    %54 = vmatpush1.msra.mxu0 0.0
    %55 = vmatprep.subr.mxu0 0.0
    %56 = vmatpush1.msra.mxu0 0.0
    %57 = vmatprep.subr.mxu0 0.0
    %58 = vmatpush1.msra.mxu0 0.0
    %59 = vmatprep.subr.mxu0 0.0
    %60 = vmatpush1.msra.mxu0 0.0
    %61 = vmatprep.subr.mxu0 0.0
    %62 = vmatpush1.msra.mxu0 0.0
    %63 = vmatprep.subr.mxu0 0.0
    %64 = vmatpush1.msra.mxu0 0.0
    %65 = vmatprep.subr.mxu0 0.0
    %66 = vmatpush1.msra.mxu0 0.0
    %67 = vmatprep.subr.mxu0 0.0
    %68 = vmatpush1.msra.mxu0 0.0
    %69 = vmatprep.subr.mxu0 0.0
    %70 = vmatpush1.msra.mxu0 0.0
    %71 = vmatprep.subr.mxu0 0.0
    %72 = vmatpush1.msra.mxu0 0.0
    %73 = vmatprep.subr.mxu0 0.0
    %74 = vmatpush1.msra.mxu0 0.0
    %75 = vmatprep.subr.mxu0 0.0
    %76 = vmatpush1.msra.mxu0 0.0
    %77 = vmatprep.subr.mxu0 0.0
    %78 = vmatpush1.msra.mxu0 0.0
    %79 = vmatprep.subr.mxu0 0.0
    %80 = vmatpush1.msra.mxu0 0.0
    %81 = vmatprep.subr.mxu0 0.0
    %82 = vmatpush1.msra.mxu0 0.0
    %83 = vmatprep.subr.mxu0 0.0
    %84 = vmatpush1.msra.mxu0 0.0
    %85 = vmatprep.subr.mxu0 0.0
    %86 = vmatpush1.msra.mxu0 0.0
    %87 = vmatprep.subr.mxu0 0.0
    %88 = vmatpush1.msra.mxu0 0.0
    %89 = vmatprep.subr.mxu0 0.0
    %90 = vmatpush1.msra.mxu0 0.0
    %91 = vmatprep.subr.mxu0 0.0
    %92 = vmatpush1.msra.mxu0 0.0
    %93 = vmatprep.subr.mxu0 0.0
    %94 = vmatpush1.msra.mxu0 0.0
    %95 = vmatprep.subr.mxu0 0.0
    %96 = vmatpush1.msra.mxu0 0.0
    %97 = vmatprep.subr.mxu0 0.0
    %98 = vmatpush1.msra.mxu0 0.0
    %99 = vmatprep.subr.mxu0 0.0
    %100 = vmatpush1.msra.mxu0 0.0
    %101 = vmatprep.mubr.f32.mxu0 0.0
    %102 = vmatmul.mubr.f32.gmra.mrb[0].mxu0 %v35
    %v103 = vpop.f32.mrb[0].mxu0
    %v104 = vadd.f32 %v31, %v103
    %v105 = vpop.f32.mrb[0].mxu0
    %106 = vdwg.mxu0
    %v107 = vtanh.pop %v104
    %v108 = vld [vmem:[%s3] sm:$0xff]
    %v109 = vld [vmem:[%s3 + $0x8] sm:$0xff]
    %v110 = vld [vmem:[%s3 + $0x10] sm:$0xff]
    %v111 = vld [vmem:[%s3 + $0x18] sm:$0xff]
    %v112 = vld [vmem:[%s3 + $0x20] sm:$0xff]
    %v113 = vld [vmem:[%s3 + $0x28] sm:$0xff]
    %v114 = vld [vmem:[%s3 + $0x30] sm:$0xff]
    %v115 = vld [vmem:[%s3 + $0x38] sm:$0xff]
    %v116 = vld [vmem:[%s3 + $0x40] sm:$0xff]
    %v117 = vld [vmem:[%s3 + $0x48] sm:$0xff]
    %v118 = vld [vmem:[%s3 + $0x50] sm:$0xff]
    %v119 = vld [vmem:[%s3 + $0x58] sm:$0xff]
    %v120 = vld [vmem:[%s3 + $0x60] sm:$0xff]
    %v121 = vld [vmem:[%s3 + $0x68] sm:$0xff]
    %v122 = vld [vmem:[%s3 + $0x70] sm:$0xff]
    %v123 = vld [vmem:[%s3 + $0x78] sm:$0xff]
    %v124 = vld [vmem:[%s4] sm:$0x1]
    %v126 = vlaneseq
    %v127 = vshrl.u32 %v126, 7
    %v128 = vsub.s32 0, %v127
    %v129 = vrot.slane %v124, %v128
    %131 = vmatprep.subr.mxu0 0.0
    %132 = vmatpush1.msra.mxu0 %v108
    %133 = vmatprep.subr.mxu0 0.0
    %134 = vmatpush1.msra.mxu0 %v109
    %135 = vmatprep.subr.mxu0 0.0
    %136 = vmatpush1.msra.mxu0 %v110
    %137 = vmatprep.subr.mxu0 0.0
    %138 = vmatpush1.msra.mxu0 %v111
    %139 = vmatprep.subr.mxu0 0.0
    %140 = vmatpush1.msra.mxu0 %v112
    %141 = vmatprep.subr.mxu0 0.0
    %142 = vmatpush1.msra.mxu0 %v113
    %143 = vmatprep.subr.mxu0 0.0
    %144 = vmatpush1.msra.mxu0 %v114
    %145 = vmatprep.subr.mxu0 0.0
    %146 = vmatpush1.msra.mxu0 %v115
    %147 = vmatprep.subr.mxu0 0.0
    %148 = vmatpush1.msra.mxu0 %v116
    %149 = vmatprep.subr.mxu0 0.0
    %150 = vmatpush1.msra.mxu0 %v117
    %151 = vmatprep.subr.mxu0 0.0
    %152 = vmatpush1.msra.mxu0 %v118
    %153 = vmatprep.subr.mxu0 0.0
    %154 = vmatpush1.msra.mxu0 %v119
    %155 = vmatprep.subr.mxu0 0.0
    %156 = vmatpush1.msra.mxu0 %v120
    %157 = vmatprep.subr.mxu0 0.0
    %158 = vmatpush1.msra.mxu0 %v121
    %159 = vmatprep.subr.mxu0 0.0
    %160 = vmatpush1.msra.mxu0 %v122
    %161 = vmatprep.subr.mxu0 0.0
    %162 = vmatpush1.msra.mxu0 %v123
    %163 = vmatprep.subr.mxu0 0.0
    %164 = vmatpush1.msra.mxu0 0.0
    %165 = vmatprep.subr.mxu0 0.0
    %166 = vmatpush1.msra.mxu0 0.0
    %167 = vmatprep.subr.mxu0 0.0
    %168 = vmatpush1.msra.mxu0 0.0
    %169 = vmatprep.subr.mxu0 0.0
    %170 = vmatpush1.msra.mxu0 0.0
    %171 = vmatprep.subr.mxu0 0.0
    %172 = vmatpush1.msra.mxu0 0.0
    %173 = vmatprep.subr.mxu0 0.0
    %174 = vmatpush1.msra.mxu0 0.0
    %175 = vmatprep.subr.mxu0 0.0
    %176 = vmatpush1.msra.mxu0 0.0
    %177 = vmatprep.subr.mxu0 0.0
    %178 = vmatpush1.msra.mxu0 0.0
    %179 = vmatprep.subr.mxu0 0.0
    %180 = vmatpush1.msra.mxu0 0.0
    %181 = vmatprep.subr.mxu0 0.0
    %182 = vmatpush1.msra.mxu0 0.0
    %183 = vmatprep.subr.mxu0 0.0
    %184 = vmatpush1.msra.mxu0 0.0
    %185 = vmatprep.subr.mxu0 0.0
    %186 = vmatpush1.msra.mxu0 0.0
    %187 = vmatprep.subr.mxu0 0.0
    %188 = vmatpush1.msra.mxu0 0.0
    %189 = vmatprep.subr.mxu0 0.0
    %190 = vmatpush1.msra.mxu0 0.0
    %191 = vmatprep.subr.mxu0 0.0
    %192 = vmatpush1.msra.mxu0 0.0
    %193 = vmatprep.subr.mxu0 0.0
    %194 = vmatpush1.msra.mxu0 0.0
    %195 = vmatprep.mubr.f32.mxu0 0.0
    %196 = vmatmul.mubr.f32.gmra.mrb[0].mxu0 %v107
    %v197 = vpop.f32.mrb[0].mxu0
    %v198 = vadd.f32 %v129, %v197
    %v199 = vpop.f32.mrb[0].mxu0
    %200 = vdwg.mxu0
    %vm201 = vcmask 130048
    %202 = vst.msk [vmem:[#allocation2] sm:$0xff] %vm201, %v198
    // Predicated region
    $region22: #{simple_forward.1} parent=1 // pred_check
      _
    $region23: #{simple_forward.1} parent=1 // pred_check_branch
      %204 = sbr.rel (0) target = $region25
    $region24: #{simple_forward.1} parent=1 // pred_region
      %s206 = ssub.s32 128, 128
      %207 = vsyncadd [#allocation3], %s206
      %s209 = sshll.u32 [#allocation2], 4
      %s210 = int_to_ptr.vmem [resolvable:$true] %s209
      %212 = dma.vmem_to_hbm [thread:$0]  %s210, 128, %s5, [#allocation3]
    $region25: #{simple_forward.1} parent=1 // pred_fallthru
      _
    // Predicated region
    $region26: #{simple_forward.1} parent=1 // pred_check
      _
    $region27: #{simple_forward.1} parent=1 // pred_check_branch
      %214 = sbr.rel (0) target = $region29
    $region28: #{simple_forward.1} parent=1 // pred_region
      %215 = dma.done [#allocation3], 128
    $region29: #{simple_forward.1} parent=1 // pred_fallthru
      _
    %216 = vsyncpa [#allocation3], 1

</llo_original>
